<compile_context>
chip_gen: v7x
topology: tpu7x:2x2x1
jax: 0.10.0
libtpu: 0.0.40
codegen_flags: <defaults>
</compile_context>

<pallas_src>
import math

import jax
import jax.numpy as jnp
from jax.experimental import pallas as pl
from jax.experimental.pallas import tpu as pltpu


def _round_up(x, m):
    return ((x + m - 1) // m) * m


def _pick_block_b(B):
    """Batch tile: a multiple of 8 that divides B, else the full batch."""
    if B % 8 != 0:
        return B
    for cand in (256, 128, 64, 32, 16, 8):
        if B % cand == 0:
            return cand
    return B


# ----------------------------------------------------------------------------
# Fused MPO-chain kernel: the entire forward is a single pallas_call.
# ----------------------------------------------------------------------------
def _make_mpo_kernel(n_mats, npout):
    def kernel(x_ref, *refs):
        t_refs = refs[:n_mats]
        o_ref = refs[n_mats]
        cur = x_ref[...]
        for t_ref in t_refs:                       # unrolled: L-1 MXU matmuls
            cur = jnp.dot(cur, t_ref[...],
                          preferred_element_type=jnp.float32)
        if cur.shape[-1] != npout:                 # drop lane padding of last step
            cur = cur[:, :npout]
        o_ref[...] = cur
    return kernel


def make_mpo_matrices(ops, Din, Dout, lane=128):
    """Per-step matrices acting on the flat per-batch activation.

    Step i of Operator.forward maps the flat (X*I*J*K,) activation to the flat
    (X*L*M*K,) activation via T_i = kron(I_X, kron(W_i.reshape(I*J, L*M), I_K)).
    Output columns are zero-padded to `lane` multiples so in-kernel
    intermediates are lane-dense (weight-side prep only; activations untouched).
    """
    L = len(Din)
    mats = []
    n_prev = math.prod(Din)                 # width of the incoming activation
    for i in range(L - 1):
        w = jnp.asarray(ops[i], jnp.float32)
        X = math.prod(Dout[:i])
        I = Din[0] if i == 0 else Dout[i]
        J = Din[i + 1]
        K = math.prod(Din[i + 2:])
        Lo, Mo = Dout[i], Dout[i + 1]
        assert w.shape == (I, J, Lo, Mo), (w.shape, (I, J, Lo, Mo))
        Wm = w.reshape(I * J, Lo * Mo)
        T = jnp.kron(jnp.eye(X, dtype=jnp.float32),
                     jnp.kron(Wm, jnp.eye(K, dtype=jnp.float32)))
        n_in, n_out = X * I * J * K, X * Lo * Mo * K
        assert n_in <= n_prev
        p_out = _round_up(n_out, lane)
        Tp = jnp.zeros((n_prev, p_out), jnp.float32).at[:n_in, :n_out].set(T)
        mats.append(Tp)
        n_prev = p_out
    return mats


def mpo_forward(x, mats, npout, *, block_b=None):
    B, npin = x.shape
    assert mats and mats[0].shape[0] == npin
    if block_b is None:
        block_b = _pick_block_b(B)
    assert B % block_b == 0, (B, block_b)
    grid = (B // block_b,)

    in_specs = [pl.BlockSpec((block_b, npin), lambda i: (i, 0))]
    for m in mats:  # small full-array weight blocks, VMEM-resident across the grid
        in_specs.append(pl.BlockSpec(m.shape, lambda i: (0, 0)))

    return pl.pallas_call(
        _make_mpo_kernel(len(mats), npout),
        out_shape=jax.ShapeDtypeStruct((B, npout), jnp.float32),
        grid=grid,
        in_specs=in_specs,
        out_specs=pl.BlockSpec((block_b, npout), lambda i: (i, 0)),
        compiler_params=pltpu.CompilerParams(
            dimension_semantics=("parallel",)),
    )(x, *mats)


# ----------------------------------------------------------------------------
# Operator module: parameter construction + forward pass
# ----------------------------------------------------------------------------
def init_operators(key, Din, Dout):
    """Synthetic init matching the __init__ shapes of Operator."""
    # TODO(synk): reset_parameters() depends on external `args`
    # (hidden_dim / vocab_size / chi); the __init__ uniform scale is used here.
    assert len(Din) == len(Dout)
    a = 1.0 / math.sqrt(math.prod(Dout))
    ops = []
    for i in range(len(Din) - 1):
        d0 = Din[i] if i == 0 else Dout[i]
        d1 = Din[i + 1]
        d2 = Dout[i]
        d3 = Dout[i + 1]
        key, sub = jax.random.split(key)
        ops.append(jax.random.uniform(sub, (d0, d1, d2, d3), jnp.float32,
                                      minval=-a, maxval=a))
    return ops


def operator_forward(x, ops, Din, Dout, *, block_b=None):
    """Pallas-backed forward, mirroring Operator.forward exactly."""
    mats = make_mpo_matrices(ops, Din, Dout)
    return mpo_forward(x.astype(jnp.float32), mats, math.prod(Dout),
                       block_b=block_b)


def operator_forward_ref(x, ops, Din, Dout):
    """Pure-JAX reference mirroring the torch.einsum path, for validation."""
    B = x.shape[0]
    L = len(Din)
    x = x.reshape(B, 1, Din[0], Din[1], -1)
    for i in range(L - 1):
        x = jnp.einsum('bxijk,ijlm->bxlmk', x, ops[i])
        Dnext = 1 if i == L - 2 else Din[i + 2]
        x = x.reshape(x.shape[0], x.shape[1] * x.shape[2], x.shape[3], Dnext, -1)
    return x.reshape(B, -1)


if __name__ == "__main__":
    Din = (3, 4, 5)
    Dout = (2, 6, 7)

    key = jax.random.PRNGKey(0)
    k_w, k_x1, k_x2 = jax.random.split(key, 3)
    ops = init_operators(k_w, Din, Dout)

    fwd = jax.jit(lambda xx: operator_forward(xx, ops, Din, Dout))

    # Small batch (single full-array block, grid=(1,)).
    B1 = 2
    x1 = jax.random.normal(k_x1, (B1, math.prod(Din)), jnp.float32)
    out1 = jax.block_until_ready(fwd(x1))
    assert out1.shape == (B1, math.prod(Dout)), out1.shape
    ref1 = operator_forward_ref(x1, ops, Din, Dout)
    assert jnp.allclose(out1, ref1, atol=1e-5, rtol=1e-5), \
        float(jnp.max(jnp.abs(out1 - ref1)))

    # Larger batch exercising the batch-tiled, megacore-parallel grid path.
    B2 = 1024
    x2 = jax.random.normal(k_x2, (B2, math.prod(Din)), jnp.float32)
    out2 = jax.block_until_ready(fwd(x2))
    assert out2.shape == (B2, math.prod(Dout)), out2.shape
    ref2 = operator_forward_ref(x2, ops, Din, Dout)
    assert jnp.allclose(out2, ref2, atol=1e-4, rtol=1e-4), \
        float(jnp.max(jnp.abs(out2 - ref2)))

    print("KERNEL_OK")
</pallas_src>

<mosaic_0001>
module attributes {stable_mosaic.version = 11 : i64} {
  func.func @kernel(%arg0: i32, %arg1: memref<2x60xf32, #tpu.memory_space<vmem>>, %arg2: memref<60x128xf32, #tpu.memory_space<vmem>>, %arg3: memref<128x128xf32, #tpu.memory_space<vmem>>, %arg4: memref<2x84xf32, #tpu.memory_space<vmem>>) attributes {dimension_semantics = [#tpu.dimension_semantics<parallel>], iteration_bounds = array<i64: 1>, scalar_prefetch = 0 : i64, scratch_operands = 0 : i64, tpu.core_type = #tpu.core_type<tc>, window_params = [{transform_indices = @transform_0, window_bounds = array<i64: 2, 60>}, {pipeline_mode = #tpu.pipeline_mode<synchronous>, transform_indices = @transform_1, window_bounds = array<i64: 60, 128>}, {pipeline_mode = #tpu.pipeline_mode<synchronous>, transform_indices = @transform_2, window_bounds = array<i64: 128, 128>}, {transform_indices = @transform_3, window_bounds = array<i64: 2, 84>}]} {
    %c0 = arith.constant 0 : index
    %c0_0 = arith.constant 0 : index
    %0 = vector.load %arg1[%c0, %c0_0] : memref<2x60xf32, #tpu.memory_space<vmem>>, vector<2x60xf32>
    %c0_1 = arith.constant 0 : index
    %c0_2 = arith.constant 0 : index
    %1 = vector.load %arg2[%c0_1, %c0_2] : memref<60x128xf32, #tpu.memory_space<vmem>>, vector<60x128xf32>
    %cst = arith.constant dense<0.000000e+00> : vector<2x128xf32>
    %2 = tpu.matmul %0, %1, %cst {dimension_numbers = #tpu.dot_dimension_numbers<[1], [0], [0], [1], [0, 0, 1, 1], [], []>} : vector<2x60xf32>, vector<60x128xf32>, vector<2x128xf32> -> vector<2x128xf32>
    %c0_3 = arith.constant 0 : index
    %c0_4 = arith.constant 0 : index
    %3 = vector.load %arg3[%c0_3, %c0_4] : memref<128x128xf32, #tpu.memory_space<vmem>>, vector<128x128xf32>
    %cst_5 = arith.constant dense<0.000000e+00> : vector<2x128xf32>
    %4 = tpu.matmul %2, %3, %cst_5 {dimension_numbers = #tpu.dot_dimension_numbers<[1], [0], [0], [1], [0, 0, 1, 1], [], []>} : vector<2x128xf32>, vector<128x128xf32>, vector<2x128xf32> -> vector<2x128xf32>
    %5 = vector.extract_strided_slice %4 {offsets = [0, 0], sizes = [2, 84], strides = [1, 1]} : vector<2x128xf32> to vector<2x84xf32>
    %c0_6 = arith.constant 0 : index
    %c0_7 = arith.constant 0 : index
    %6 = vector.load %arg4[%c0_6, %c0_7] : memref<2x84xf32, #tpu.memory_space<vmem>>, vector<2x84xf32>
    tpu.vector_store %arg4[%c0_6, %c0_7], %5 {strides = array<i32>} : memref<2x84xf32, #tpu.memory_space<vmem>>, vector<2x84xf32>,
    return
  }
  func.func @transform_0(%arg0: i32) -> (i32, i32) {
    %c0_i32 = arith.constant 0 : i32
    %c0_i32_0 = arith.constant 0 : i32
    return %arg0, %c0_i32 : i32, i32
  }
  func.func @transform_1(%arg0: i32) -> (i32, i32) {
    %c0_i32 = arith.constant 0 : i32
    %c0_i32_0 = arith.constant 0 : i32
    %c0_i32_1 = arith.constant 0 : i32
    return %c0_i32, %c0_i32_0 : i32, i32
  }
  func.func @transform_2(%arg0: i32) -> (i32, i32) {
    %c0_i32 = arith.constant 0 : i32
    %c0_i32_0 = arith.constant 0 : i32
    %c0_i32_1 = arith.constant 0 : i32
    return %c0_i32, %c0_i32_0 : i32, i32
  }
  func.func @transform_3(%arg0: i32) -> (i32, i32) {
    %c0_i32 = arith.constant 0 : i32
    %c0_i32_0 = arith.constant 0 : i32
    return %arg0, %c0_i32 : i32, i32
  }
}

</mosaic_0001>

<llo_original>
// kernel: _lambda_.1
$region0: #{_lambda_.1}
  #allocation0 [shape = 'u32[]', space=smem, size = 0x4, offset = 0x4, fixed_abs, tag = 'smem constant byte address 0x4 - core index']
  #allocation1 [shape = 'u32[144,128]{1,0:T(1,128)}', space=vmem, size = 0x12000, scoped, tag = 'internal scratch']
  %s0 = inlined_call_operand.vmem [shape: f32[2,60], index: 0, kind: input, shape index: {}]
  %s1 = inlined_call_operand.vmem [shape: f32[60,128], index: 1, kind: input, shape index: {}]
  %s2 = inlined_call_operand.vmem [shape: f32[128,128], index: 2, kind: input, shape index: {}]
  %s3 = inlined_call_operand.hbm [shape: f32[2,84], index: 3, kind: output, shape index: {}]
  %s4 = sld [smem:[#allocation0]]
  $region22: #{_lambda_.1} parent=0
    _
  %s6 = ssub.s32 1, %s4
  %s7 = scalar_select 0, %s6, %s4
  $region1: #{_lambda_.1} parent=0
    #allocation2 [shape = 'u8[1024]{0}', space=vmem, size = 0x400, scoped, tag = 'output window, operand 0, single buffered']
    #allocation3 [shape = 's32[1]{0}', space=sflag, size = 0x4, scoped, tag = 'scoped memory for _lambda_.1']
    %8 = vsyncpa [#allocation3], 0
    // Predicated region
    $region2: #{_lambda_.1} parent=1 // pred_check
      _
    $region3: #{_lambda_.1} parent=1 // pred_check_branch
      %10 = sbr.rel (0) target = $region5
    $region4: #{_lambda_.1} parent=1 // pred_region
      _
    $region5: #{_lambda_.1} parent=1 // pred_fallthru
      _
    // Predicated region
    $region6: #{_lambda_.1} parent=1 // pred_check
      _
    $region7: #{_lambda_.1} parent=1 // pred_check_branch
      %12 = sbr.rel (0) target = $region9
    $region8: #{_lambda_.1} parent=1 // pred_region
      _
    $region9: #{_lambda_.1} parent=1 // pred_fallthru
      _
    // Predicated region
    $region10: #{_lambda_.1} parent=1 // pred_check
      _
    $region11: #{_lambda_.1} parent=1 // pred_check_branch
      %14 = sbr.rel (0) target = $region13
    $region12: #{_lambda_.1} parent=1 // pred_region
      _
    $region13: #{_lambda_.1} parent=1 // pred_fallthru
      _
    %v15 = vld [vmem:[%s0] sm:$0x3]
    %v16 = vld [vmem:[%s1] sm:$0xff]
    %v17 = vld [vmem:[%s1 + $0x8] sm:$0xff]
    %v18 = vld [vmem:[%s1 + $0x10] sm:$0xff]
    %v19 = vld [vmem:[%s1 + $0x18] sm:$0xff]
    %v20 = vld [vmem:[%s1 + $0x20] sm:$0xff]
    %v21 = vld [vmem:[%s1 + $0x28] sm:$0xff]
    %v22 = vld [vmem:[%s1 + $0x30] sm:$0xff]
    %v23 = vld [vmem:[%s1 + $0x38] sm:$0xf]
    %vm24 = vcmask 490496
    %v26 = vsel %vm24, %v15, 0
    %vm28 = vcmask 1043456
    %v30 = vsel %vm28, %v23, 0
    %32 = vmatprep.subr.mxu0 0.0
    %33 = vmatpush1.msra.mxu0 %v16
    %34 = vmatprep.subr.mxu0 0.0
    %35 = vmatpush1.msra.mxu0 %v17
    %36 = vmatprep.subr.mxu0 0.0
    %37 = vmatpush1.msra.mxu0 %v18
    %38 = vmatprep.subr.mxu0 0.0
    %39 = vmatpush1.msra.mxu0 %v19
    %40 = vmatprep.subr.mxu0 0.0
    %41 = vmatpush1.msra.mxu0 %v20
    %42 = vmatprep.subr.mxu0 0.0
    %43 = vmatpush1.msra.mxu0 %v21
    %44 = vmatprep.subr.mxu0 0.0
    %45 = vmatpush1.msra.mxu0 %v22
    %46 = vmatprep.subr.mxu0 0.0
    %47 = vmatpush1.msra.mxu0 %v30
    %48 = vmatprep.subr.mxu0 0.0
    %49 = vmatpush1.msra.mxu0 0.0
    %50 = vmatprep.subr.mxu0 0.0
    %51 = vmatpush1.msra.mxu0 0.0
    %52 = vmatprep.subr.mxu0 0.0
    %53 = vmatpush1.msra.mxu0 0.0
    %54 = vmatprep.subr.mxu0 0.0
    %55 = vmatpush1.msra.mxu0 0.0
    %56 = vmatprep.subr.mxu0 0.0
    %57 = vmatpush1.msra.mxu0 0.0
    %58 = vmatprep.subr.mxu0 0.0
    %59 = vmatpush1.msra.mxu0 0.0
    %60 = vmatprep.subr.mxu0 0.0
    %61 = vmatpush1.msra.mxu0 0.0
    %62 = vmatprep.subr.mxu0 0.0
    %63 = vmatpush1.msra.mxu0 0.0
    %64 = vmatprep.subr.mxu0 0.0
    %65 = vmatpush1.msra.mxu0 0.0
    %66 = vmatprep.subr.mxu0 0.0
    %67 = vmatpush1.msra.mxu0 0.0
    %68 = vmatprep.subr.mxu0 0.0
    %69 = vmatpush1.msra.mxu0 0.0
    %70 = vmatprep.subr.mxu0 0.0
    %71 = vmatpush1.msra.mxu0 0.0
    %72 = vmatprep.subr.mxu0 0.0
    %73 = vmatpush1.msra.mxu0 0.0
    %74 = vmatprep.subr.mxu0 0.0
    %75 = vmatpush1.msra.mxu0 0.0
    %76 = vmatprep.subr.mxu0 0.0
    %77 = vmatpush1.msra.mxu0 0.0
    %78 = vmatprep.subr.mxu0 0.0
    %79 = vmatpush1.msra.mxu0 0.0
    %80 = vmatprep.subr.mxu0 0.0
    %81 = vmatpush1.msra.mxu0 0.0
    %82 = vmatprep.subr.mxu0 0.0
    %83 = vmatpush1.msra.mxu0 0.0
    %84 = vmatprep.subr.mxu0 0.0
    %85 = vmatpush1.msra.mxu0 0.0
    %86 = vmatprep.subr.mxu0 0.0
    %87 = vmatpush1.msra.mxu0 0.0
    %88 = vmatprep.subr.mxu0 0.0
    %89 = vmatpush1.msra.mxu0 0.0
    %90 = vmatprep.subr.mxu0 0.0
    %91 = vmatpush1.msra.mxu0 0.0
    %92 = vmatprep.subr.mxu0 0.0
    %93 = vmatpush1.msra.mxu0 0.0
    %94 = vmatprep.subr.mxu0 0.0
    %95 = vmatpush1.msra.mxu0 0.0
    %96 = vmatprep.mubr.f32.mxu0 0.0
    %97 = vmatmul.mubr.f32.gmra.mrb[0].mxu0 %v26
    %v98 = vpop.f32.mrb[0].mxu0
    %v99 = vadd.f32 0.0, %v98
    %v100 = vpop.f32.mrb[0].mxu0
    %101 = vdwg.mxu0
    %v102 = vld [vmem:[%s2] sm:$0xff]
    %v103 = vld [vmem:[%s2 + $0x8] sm:$0xff]
    %v104 = vld [vmem:[%s2 + $0x10] sm:$0xff]
    %v105 = vld [vmem:[%s2 + $0x18] sm:$0xff]
    %v106 = vld [vmem:[%s2 + $0x20] sm:$0xff]
    %v107 = vld [vmem:[%s2 + $0x28] sm:$0xff]
    %v108 = vld [vmem:[%s2 + $0x30] sm:$0xff]
    %v109 = vld [vmem:[%s2 + $0x38] sm:$0xff]
    %v110 = vld [vmem:[%s2 + $0x40] sm:$0xff]
    %v111 = vld [vmem:[%s2 + $0x48] sm:$0xff]
    %v112 = vld [vmem:[%s2 + $0x50] sm:$0xff]
    %v113 = vld [vmem:[%s2 + $0x58] sm:$0xff]
    %v114 = vld [vmem:[%s2 + $0x60] sm:$0xff]
    %v115 = vld [vmem:[%s2 + $0x68] sm:$0xff]
    %v116 = vld [vmem:[%s2 + $0x70] sm:$0xff]
    %v117 = vld [vmem:[%s2 + $0x78] sm:$0xff]
    %118 = vmatprep.subr.mxu0 0.0
    %119 = vmatpush1.msra.mxu0 %v102
    %120 = vmatprep.subr.mxu0 0.0
    %121 = vmatpush1.msra.mxu0 %v103
    %122 = vmatprep.subr.mxu0 0.0
    %123 = vmatpush1.msra.mxu0 %v104
    %124 = vmatprep.subr.mxu0 0.0
    %125 = vmatpush1.msra.mxu0 %v105
    %126 = vmatprep.subr.mxu0 0.0
    %127 = vmatpush1.msra.mxu0 %v106
    %128 = vmatprep.subr.mxu0 0.0
    %129 = vmatpush1.msra.mxu0 %v107
    %130 = vmatprep.subr.mxu0 0.0
    %131 = vmatpush1.msra.mxu0 %v108
    %132 = vmatprep.subr.mxu0 0.0
    %133 = vmatpush1.msra.mxu0 %v109
    %134 = vmatprep.subr.mxu0 0.0
    %135 = vmatpush1.msra.mxu0 %v110
    %136 = vmatprep.subr.mxu0 0.0
    %137 = vmatpush1.msra.mxu0 %v111
    %138 = vmatprep.subr.mxu0 0.0
    %139 = vmatpush1.msra.mxu0 %v112
    %140 = vmatprep.subr.mxu0 0.0
    %141 = vmatpush1.msra.mxu0 %v113
    %142 = vmatprep.subr.mxu0 0.0
    %143 = vmatpush1.msra.mxu0 %v114
    %144 = vmatprep.subr.mxu0 0.0
    %145 = vmatpush1.msra.mxu0 %v115
    %146 = vmatprep.subr.mxu0 0.0
    %147 = vmatpush1.msra.mxu0 %v116
    %148 = vmatprep.subr.mxu0 0.0
    %149 = vmatpush1.msra.mxu0 %v117
    %150 = vmatprep.subr.mxu0 0.0
    %151 = vmatpush1.msra.mxu0 0.0
    %152 = vmatprep.subr.mxu0 0.0
    %153 = vmatpush1.msra.mxu0 0.0
    %154 = vmatprep.subr.mxu0 0.0
    %155 = vmatpush1.msra.mxu0 0.0
    %156 = vmatprep.subr.mxu0 0.0
    %157 = vmatpush1.msra.mxu0 0.0
    %158 = vmatprep.subr.mxu0 0.0
    %159 = vmatpush1.msra.mxu0 0.0
    %160 = vmatprep.subr.mxu0 0.0
    %161 = vmatpush1.msra.mxu0 0.0
    %162 = vmatprep.subr.mxu0 0.0
    %163 = vmatpush1.msra.mxu0 0.0
    %164 = vmatprep.subr.mxu0 0.0
    %165 = vmatpush1.msra.mxu0 0.0
    %166 = vmatprep.subr.mxu0 0.0
    %167 = vmatpush1.msra.mxu0 0.0
    %168 = vmatprep.subr.mxu0 0.0
    %169 = vmatpush1.msra.mxu0 0.0
    %170 = vmatprep.subr.mxu0 0.0
    %171 = vmatpush1.msra.mxu0 0.0
    %172 = vmatprep.subr.mxu0 0.0
    %173 = vmatpush1.msra.mxu0 0.0
    %174 = vmatprep.subr.mxu0 0.0
    %175 = vmatpush1.msra.mxu0 0.0
    %176 = vmatprep.subr.mxu0 0.0
    %177 = vmatpush1.msra.mxu0 0.0
    %178 = vmatprep.subr.mxu0 0.0
    %179 = vmatpush1.msra.mxu0 0.0
    %180 = vmatprep.subr.mxu0 0.0
    %181 = vmatpush1.msra.mxu0 0.0
    %182 = vmatprep.mubr.f32.mxu0 0.0
    %183 = vmatmul.mubr.f32.gmra.mrb[0].mxu0 %v99
    %v184 = vpop.f32.mrb[0].mxu0
    %v185 = vadd.f32 0.0, %v184
    %v186 = vpop.f32.mrb[0].mxu0
    %187 = vdwg.mxu0
    %vm188 = vcmask 680960
    %189 = vst.msk [vmem:[#allocation2] sm:$0x3] %vm188, %v185
    // Predicated region
    $region14: #{_lambda_.1} parent=1 // pred_check
      _
    $region15: #{_lambda_.1} parent=1 // pred_check_branch
      %191 = sbr.rel (0) target = $region17
    $region16: #{_lambda_.1} parent=1 // pred_region
      %s193 = ssub.s32 32, 32
      %194 = vsyncadd [#allocation3], %s193
      %s196 = sshll.u32 [#allocation2], 4
      %s197 = int_to_ptr.vmem [resolvable:$true] %s196
      %199 = dma.vmem_to_hbm [thread:$0]  %s197, 32, %s3, [#allocation3]
    $region17: #{_lambda_.1} parent=1 // pred_fallthru
      _
    // Predicated region
    $region18: #{_lambda_.1} parent=1 // pred_check
      _
    $region19: #{_lambda_.1} parent=1 // pred_check_branch
      %201 = sbr.rel (0) target = $region21
    $region20: #{_lambda_.1} parent=1 // pred_region
      %202 = dma.done [#allocation3], 32
    $region21: #{_lambda_.1} parent=1 // pred_fallthru
      _
    %203 = vsyncpa [#allocation3], 1

</llo_original>
